<compile_context>
chip_gen: v6e
topology: v6e:2x2x1
jax: 0.10.0
libtpu: 0.0.40
codegen_flags: <defaults>
</compile_context>

<pallas_src>
import functools

import jax
import jax.numpy as jnp
from jax.experimental import pallas as pl
from jax.experimental.pallas import tpu as pltpu


def _ce2d_kernel(x_ref, t_ref, sum_ref, cnt_ref, acc_ref, cnt_acc_ref, *,
                 num_classes, l_total, tile_l):
    """One (C, tile_l) slab of logits for one batch image.

    x_ref:   (C, tile_l)  logits (any float dtype)
    t_ref:   (1, tile_l)  int32 class ids
    sum_ref: (1, 1)       per-image sum of NLL        (written on last j)
    cnt_ref: (1, 1)       per-image count of valid px (written on last j)
    acc_ref / cnt_acc_ref: (1, tile_l) f32 per-lane partial sums.
    """
    j = pl.program_id(1)

    @pl.when(j == 0)
    def _():
        acc_ref[...] = jnp.zeros_like(acc_ref)
        cnt_acc_ref[...] = jnp.zeros_like(cnt_acc_ref)

    x = x_ref[...].astype(jnp.float32)            # (C, TL)
    t = t_ref[...]                                # (1, TL) int32

    # Numerically-stable log-softmax over the channel (sublane) axis.
    m = jnp.max(x, axis=0, keepdims=True)         # (1, TL)
    xs = x - m                                    # shifted logits
    lse_s = jnp.log(jnp.sum(jnp.exp(xs), axis=0, keepdims=True))   # (1, TL)

    # Gather the target-class shifted logit via a one-hot compare on sublanes.
    cls = jax.lax.broadcasted_iota(jnp.int32, x.shape, 0)           # (C, TL)
    picked_s = jnp.sum(jnp.where(cls == t, xs, 0.0), axis=0, keepdims=True)

    # Per-pixel NLL of log_softmax: (lse + m) - (picked_s + m) = lse_s - picked_s.
    nll = lse_s - picked_s                        # (1, TL)

    # Validity: ignore_index / out-of-range targets (PyTorch default -100) ...
    valid = jnp.logical_and(t >= 0, t < num_classes)
    # ... and, for ragged spatial sizes, lanes past the end of the image.
    if l_total % tile_l != 0:
        pos = j * tile_l + jax.lax.broadcasted_iota(jnp.int32, t.shape, 1)
        valid = jnp.logical_and(valid, pos < l_total)

    acc_ref[...] = acc_ref[...] + jnp.where(valid, nll, 0.0)
    cnt_acc_ref[...] = cnt_acc_ref[...] + valid.astype(jnp.float32)

    @pl.when(j == pl.num_programs(1) - 1)
    def _():
        sum_ref[...] = jnp.sum(acc_ref[...], axis=-1, keepdims=True)
        cnt_ref[...] = jnp.sum(cnt_acc_ref[...], axis=-1, keepdims=True)


def cross_entropy_loss_2d(outputs, targets, *, tile_budget_bytes=4 << 20):
    """outputs: (N, C, H, W) float, targets: (N, H, W) int.

    Returns scalar mean NLL over non-ignored pixels (weight=None,
    ignore_index=-100 semantics, matching nn.NLLLoss defaults).
    """
    N, C, H, W = outputs.shape
    L = H * W
    esize = jnp.dtype(outputs.dtype).itemsize

    # Free reshapes: keep the NCHW-native memory layout (C on sublanes, H*W on lanes).
    x3d = outputs.reshape(N, C, L)
    t3d = targets.reshape(N, 1, L).astype(jnp.int32)

    # Lane-tile selection: biggest multiple of 128 fitting the per-buffer VMEM
    # budget (double-buffered by the pipeline), capped at the spatial extent.
    if L <= 128:
        tile_l = L                                   # full-extent block is allowed
    else:
        cap = max(128, (tile_budget_bytes // max(C * esize, 1)) // 128 * 128)
        l_floor = L if L % 128 == 0 else (L // 128) * 128
        tile_l = int(min(cap, l_floor))
    grid_l = pl.cdiv(L, tile_l)

    # Scoped-VMEM request: double-buffered logits + targets blocks + accumulators.
    block_bytes = 2 * (C * tile_l * esize) + 2 * (tile_l * 4) + 2 * (tile_l * 4)
    vmem_limit = int(min(64 << 20, max(16 << 20, 3 * block_bytes)))

    kernel = functools.partial(
        _ce2d_kernel, num_classes=C, l_total=L, tile_l=tile_l)

    sums, counts = pl.pallas_call(
        kernel,
        out_shape=(jax.ShapeDtypeStruct((N, 1, 1), jnp.float32),
                   jax.ShapeDtypeStruct((N, 1, 1), jnp.float32)),
        grid_spec=pltpu.PrefetchScalarGridSpec(
            num_scalar_prefetch=0,
            grid=(N, grid_l),
            in_specs=[
                pl.BlockSpec((None, C, tile_l), lambda n, j: (n, 0, j)),
                pl.BlockSpec((None, 1, tile_l), lambda n, j: (n, 0, j)),
            ],
            out_specs=[
                pl.BlockSpec((None, 1, 1), lambda n, j: (n, 0, 0)),
                pl.BlockSpec((None, 1, 1), lambda n, j: (n, 0, 0)),
            ],
            scratch_shapes=[
                pltpu.VMEM((1, tile_l), jnp.float32),
                pltpu.VMEM((1, tile_l), jnp.float32),
            ],
        ),
        compiler_params=pltpu.CompilerParams(
            dimension_semantics=("parallel", "arbitrary"),
            vmem_limit_bytes=vmem_limit,
        ),
        cost_estimate=pl.CostEstimate(
            flops=int(6 * N * L * C),
            transcendentals=int(N * L * (C + 1)),
            bytes_accessed=int(N * C * L * esize + N * L * 4 + 2 * N * 4),
        ),
    )(x3d, t3d)

    total = jnp.sum(sums)
    count = jnp.sum(counts)
    return total / count


def _reference(outputs, targets, num_classes):
    """Pure-JAX reference matching nn.NLLLoss(weight=None) on log_softmax."""
    logp = jax.nn.log_softmax(outputs.astype(jnp.float32), axis=1)  # (N, C, H, W)
    t = targets.astype(jnp.int32)
    valid = jnp.logical_and(t >= 0, t < num_classes)
    tc = jnp.clip(t, 0, num_classes - 1)
    picked = jnp.take_along_axis(logp, tc[:, None, :, :], axis=1)[:, 0]  # (N, H, W)
    return -jnp.sum(jnp.where(valid, picked, 0.0)) / jnp.sum(valid)


if __name__ == "__main__":
    key = jax.random.PRNGKey(0)

    # Test 1: canonical small shape, all targets valid (matches the module's
    # default CrossEntropyLoss2d usage).
    k1, k2, k3, k4 = jax.random.split(key, 4)
    N, C, H, W = 2, 4, 16, 16
    outputs = jax.random.normal(k1, (N, C, H, W), dtype=jnp.float32)
    targets = jax.random.randint(k2, (N, H, W), 0, C, dtype=jnp.int32)

    loss = jax.block_until_ready(cross_entropy_loss_2d(outputs, targets))
    ref = _reference(outputs, targets, C)
    assert jnp.allclose(loss, ref, rtol=1e-5, atol=1e-5), (loss, ref)

    # Test 2: ragged spatial size (exercises the lane mask) + ignore_index=-100
    # pixels, non-power-of-two class count.
    N2, C2, H2, W2 = 2, 5, 20, 20
    outputs2 = jax.random.normal(k3, (N2, C2, H2, W2), dtype=jnp.float32)
    targets2 = jax.random.randint(k4, (N2, H2, W2), 0, C2, dtype=jnp.int32)
    targets2 = targets2.at[0, 0, :3].set(-100)   # ignored pixels

    loss2 = jax.block_until_ready(cross_entropy_loss_2d(outputs2, targets2))
    ref2 = _reference(outputs2, targets2, C2)
    assert jnp.allclose(loss2, ref2, rtol=1e-5, atol=1e-5), (loss2, ref2)

    print("KERNEL_OK")
</pallas_src>

<mosaic_0001>
module attributes {stable_mosaic.version = 11 : i64} {
  func.func @_ce2d_kernel(%arg0: i32, %arg1: i32, %arg2: memref<1x4x256xf32, #tpu.memory_space<vmem>>, %arg3: memref<1x1x256xi32, #tpu.memory_space<vmem>>, %arg4: memref<1x1x1xf32, #tpu.memory_space<vmem>>, %arg5: memref<1x1x1xf32, #tpu.memory_space<vmem>>, %arg6: memref<1x256xf32, #tpu.memory_space<vmem>>, %arg7: memref<1x256xf32, #tpu.memory_space<vmem>>) attributes {dimension_semantics = [#tpu.dimension_semantics<parallel>, #tpu.dimension_semantics<arbitrary>], iteration_bounds = array<i64: 2, 1>, scalar_prefetch = 0 : i64, scratch_operands = 2 : i64, tpu.core_type = #tpu.core_type<tc>, window_params = [{transform_indices = @transform_0, window_bounds = array<i64: 1, 4, 256>}, {transform_indices = @transform_1, window_bounds = array<i64: 1, 1, 256>}, {transform_indices = @transform_2, window_bounds = array<i64: 1, 1, 1>}, {transform_indices = @transform_3, window_bounds = array<i64: 1, 1, 1>}]} {
    %c0_i32 = arith.constant 0 : i32
    %0 = arith.cmpi eq, %arg1, %c0_i32 : i32
    %1 = arith.extui %0 : i1 to i32
    %c0_i32_0 = arith.constant 0 : i32
    %2 = arith.cmpi ne, %1, %c0_i32_0 : i32
    scf.if %2 {
      %cst_21 = arith.constant 0.000000e+00 : f32
      %41 = vector.broadcast %cst_21 : f32 to vector<1x256xf32>
      %c0_22 = arith.constant 0 : index
      %c0_23 = arith.constant 0 : index
      %42 = vector.load %arg6[%c0_22, %c0_23] : memref<1x256xf32, #tpu.memory_space<vmem>>, vector<1x256xf32>
      tpu.vector_store %arg6[%c0_22, %c0_23], %41 {strides = array<i32>} : memref<1x256xf32, #tpu.memory_space<vmem>>, vector<1x256xf32>,
      %cst_24 = arith.constant 0.000000e+00 : f32
      %43 = vector.broadcast %cst_24 : f32 to vector<1x256xf32>
      %c0_25 = arith.constant 0 : index
      %c0_26 = arith.constant 0 : index
      %44 = vector.load %arg7[%c0_25, %c0_26] : memref<1x256xf32, #tpu.memory_space<vmem>>, vector<1x256xf32>
      tpu.vector_store %arg7[%c0_25, %c0_26], %43 {strides = array<i32>} : memref<1x256xf32, #tpu.memory_space<vmem>>, vector<1x256xf32>,
    } else {
    }
    %c0 = arith.constant 0 : index
    %c0_1 = arith.constant 0 : index
    %c0_2 = arith.constant 0 : index
    %3 = vector.load %arg2[%c0, %c0_1, %c0_2] : memref<1x4x256xf32, #tpu.memory_space<vmem>>, vector<1x4x256xf32>
    %4 = vector.shape_cast %3 : vector<1x4x256xf32> to vector<4x256xf32>
    %c0_3 = arith.constant 0 : index
    %c0_4 = arith.constant 0 : index
    %c0_5 = arith.constant 0 : index
    %5 = vector.load %arg3[%c0_3, %c0_4, %c0_5] : memref<1x1x256xi32, #tpu.memory_space<vmem>>, vector<1x1x256xi32>
    %6 = vector.shape_cast %5 : vector<1x1x256xi32> to vector<1x256xi32>
    %cst = arith.constant dense<0xFF800000> : vector<256xf32>
    %7 = vector.multi_reduction <maximumf>, %4, %cst [0] : vector<4x256xf32> to vector<256xf32>
    %8 = vector.shape_cast %7 : vector<256xf32> to vector<1x256xf32>
    %9 = vector.broadcast %8 : vector<1x256xf32> to vector<4x256xf32>
    %10 = arith.subf %4, %9 : vector<4x256xf32>
    %11 = math.exp %10 : vector<4x256xf32>
    %cst_6 = arith.constant dense<0.000000e+00> : vector<256xf32>
    %12 = vector.multi_reduction <add>, %11, %cst_6 [0] : vector<4x256xf32> to vector<256xf32>
    %13 = vector.shape_cast %12 : vector<256xf32> to vector<1x256xf32>
    %14 = math.log %13 : vector<1x256xf32>
    %15 = tpu.iota {dimensions = array<i32: 0>} : vector<4x256xi32>
    %16 = vector.broadcast %6 : vector<1x256xi32> to vector<4x256xi32>
    %17 = arith.cmpi eq, %15, %16 : vector<4x256xi32>
    %cst_7 = arith.constant 0.000000e+00 : f32
    %18 = vector.broadcast %cst_7 : f32 to vector<4x256xf32>
    %19 = arith.select %17, %10, %18 : vector<4x256xi1>, vector<4x256xf32>
    %cst_8 = arith.constant dense<0.000000e+00> : vector<256xf32>
    %20 = vector.multi_reduction <add>, %19, %cst_8 [0] : vector<4x256xf32> to vector<256xf32>
    %21 = vector.shape_cast %20 : vector<256xf32> to vector<1x256xf32>
    %22 = arith.subf %14, %21 : vector<1x256xf32>
    %c0_i32_9 = arith.constant 0 : i32
    %23 = vector.broadcast %c0_i32_9 : i32 to vector<1x256xi32>
    %24 = arith.cmpi sge, %6, %23 : vector<1x256xi32>
    %c4_i32 = arith.constant 4 : i32
    %25 = vector.broadcast %c4_i32 : i32 to vector<1x256xi32>
    %26 = arith.cmpi slt, %6, %25 : vector<1x256xi32>
    %27 = arith.andi %24, %26 : vector<1x256xi1>
    %c0_10 = arith.constant 0 : index
    %c0_11 = arith.constant 0 : index
    %28 = vector.load %arg6[%c0_10, %c0_11] : memref<1x256xf32, #tpu.memory_space<vmem>>, vector<1x256xf32>
    %cst_12 = arith.constant 0.000000e+00 : f32
    %29 = vector.broadcast %cst_12 : f32 to vector<1x256xf32>
    %30 = arith.select %27, %22, %29 : vector<1x256xi1>, vector<1x256xf32>
    %31 = arith.addf %28, %30 : vector<1x256xf32>
    %c0_13 = arith.constant 0 : index
    %c0_14 = arith.constant 0 : index
    %32 = vector.load %arg6[%c0_13, %c0_14] : memref<1x256xf32, #tpu.memory_space<vmem>>, vector<1x256xf32>
    tpu.vector_store %arg6[%c0_13, %c0_14], %31 {strides = array<i32>} : memref<1x256xf32, #tpu.memory_space<vmem>>, vector<1x256xf32>,
    %c0_15 = arith.constant 0 : index
    %c0_16 = arith.constant 0 : index
    %33 = vector.load %arg7[%c0_15, %c0_16] : memref<1x256xf32, #tpu.memory_space<vmem>>, vector<1x256xf32>
    %34 = arith.extui %27 : vector<1x256xi1> to vector<1x256xi32>
    %35 = arith.sitofp %34 : vector<1x256xi32> to vector<1x256xf32>
    %36 = arith.addf %33, %35 : vector<1x256xf32>
    %c0_17 = arith.constant 0 : index
    %c0_18 = arith.constant 0 : index
    %37 = vector.load %arg7[%c0_17, %c0_18] : memref<1x256xf32, #tpu.memory_space<vmem>>, vector<1x256xf32>
    tpu.vector_store %arg7[%c0_17, %c0_18], %36 {strides = array<i32>} : memref<1x256xf32, #tpu.memory_space<vmem>>, vector<1x256xf32>,
    %c0_i32_19 = arith.constant 0 : i32
    %38 = arith.cmpi eq, %arg1, %c0_i32_19 : i32
    %39 = arith.extui %38 : i1 to i32
    %c0_i32_20 = arith.constant 0 : i32
    %40 = arith.cmpi ne, %39, %c0_i32_20 : i32
    scf.if %40 {
      %c0_21 = arith.constant 0 : index
      %c0_22 = arith.constant 0 : index
      %41 = vector.load %arg6[%c0_21, %c0_22] : memref<1x256xf32, #tpu.memory_space<vmem>>, vector<1x256xf32>
      %cst_23 = arith.constant dense<0.000000e+00> : vector<1xf32>
      %42 = vector.multi_reduction <add>, %41, %cst_23 [1] : vector<1x256xf32> to vector<1xf32>
      %43 = vector.shape_cast %42 : vector<1xf32> to vector<1x1xf32>
      %c0_24 = arith.constant 0 : index
      %c0_25 = arith.constant 0 : index
      %c0_26 = arith.constant 0 : index
      %44 = vector.load %arg4[%c0_24, %c0_25, %c0_26] : memref<1x1x1xf32, #tpu.memory_space<vmem>>, vector<1x1x1xf32>
      %45 = vector.shape_cast %44 : vector<1x1x1xf32> to vector<1x1xf32>
      %46 = vector.shape_cast %43 : vector<1x1xf32> to vector<1x1x1xf32>
      tpu.vector_store %arg4[%c0_24, %c0_25, %c0_26], %46 {strides = array<i32>} : memref<1x1x1xf32, #tpu.memory_space<vmem>>, vector<1x1x1xf32>,
      %c0_27 = arith.constant 0 : index
      %c0_28 = arith.constant 0 : index
      %47 = vector.load %arg7[%c0_27, %c0_28] : memref<1x256xf32, #tpu.memory_space<vmem>>, vector<1x256xf32>
      %cst_29 = arith.constant dense<0.000000e+00> : vector<1xf32>
      %48 = vector.multi_reduction <add>, %47, %cst_29 [1] : vector<1x256xf32> to vector<1xf32>
      %49 = vector.shape_cast %48 : vector<1xf32> to vector<1x1xf32>
      %c0_30 = arith.constant 0 : index
      %c0_31 = arith.constant 0 : index
      %c0_32 = arith.constant 0 : index
      %50 = vector.load %arg5[%c0_30, %c0_31, %c0_32] : memref<1x1x1xf32, #tpu.memory_space<vmem>>, vector<1x1x1xf32>
      %51 = vector.shape_cast %50 : vector<1x1x1xf32> to vector<1x1xf32>
      %52 = vector.shape_cast %49 : vector<1x1xf32> to vector<1x1x1xf32>
      tpu.vector_store %arg5[%c0_30, %c0_31, %c0_32], %52 {strides = array<i32>} : memref<1x1x1xf32, #tpu.memory_space<vmem>>, vector<1x1x1xf32>,
    } else {
    }
    return
  }
  func.func @transform_0(%arg0: i32, %arg1: i32) -> (i32, i32, i32) {
    %c0_i32 = arith.constant 0 : i32
    %c0_i32_0 = arith.constant 0 : i32
    return %arg0, %c0_i32, %arg1 : i32, i32, i32
  }
  func.func @transform_1(%arg0: i32, %arg1: i32) -> (i32, i32, i32) {
    %c0_i32 = arith.constant 0 : i32
    %c0_i32_0 = arith.constant 0 : i32
    return %arg0, %c0_i32, %arg1 : i32, i32, i32
  }
  func.func @transform_2(%arg0: i32, %arg1: i32) -> (i32, i32, i32) {
    %c0_i32 = arith.constant 0 : i32
    %c0_i32_0 = arith.constant 0 : i32
    %c0_i32_1 = arith.constant 0 : i32
    return %arg0, %c0_i32, %c0_i32_0 : i32, i32, i32
  }
  func.func @transform_3(%arg0: i32, %arg1: i32) -> (i32, i32, i32) {
    %c0_i32 = arith.constant 0 : i32
    %c0_i32_0 = arith.constant 0 : i32
    %c0_i32_1 = arith.constant 0 : i32
    return %arg0, %c0_i32, %c0_i32_0 : i32, i32, i32
  }
}

</mosaic_0001>

<llo_original>
// kernel: tpu_custom_call.1
$region0: #{tpu_custom_call.1}
  #allocation0 [shape = 'u32[]', space=smem, size = 0x4, offset = 0x4, fixed_abs, tag = 'smem constant byte address 0x4 - core index']
  #allocation1 [shape = 'u32[144,128]{1,0:T(1,128)}', space=vmem, size = 0x12000, scoped, tag = 'internal scratch']
  #allocation2 [shape = 'f32[1,256]{1,0:T(1,128)}', space=vmem, size = 0x400, scoped, tag = 'scratch operand']
  #allocation3 [shape = 'f32[1,256]{1,0:T(1,128)}', space=vmem, size = 0x400, scoped, tag = 'scratch operand']
  %s0 = inlined_call_operand.hbm [shape: f32[2,4,256], index: 0, kind: input, shape index: {}]
  %s1 = inlined_call_operand.hbm [shape: s32[2,1,256], index: 1, kind: input, shape index: {}]
  %s2 = inlined_call_operand.vmem [shape: f32[2,1,1], index: 2, kind: output, shape index: {0}]
  %s3 = inlined_call_operand.vmem [shape: f32[2,1,1], index: 3, kind: output, shape index: {1}]
  %4 = xla_tuple %s2, %s3
  %s5 = sld [smem:[#allocation0]]
  $region65: #{tpu_custom_call.1} parent=0
    _
  %s7 = ssub.s32 1, %s5
  %s8 = scalar_select 0, %s7, %s5
  $region1: #{tpu_custom_call.1} parent=0
    #allocation4 [shape = 'u8[8192]{0}', space=vmem, size = 0x2000, scoped, tag = 'input window, operand 0']
    #allocation5 [shape = 's32[2]{0}', space=sflag, size = 0x8, scoped, tag = 'scoped memory for tpu_custom_call.1']
    #allocation6 [shape = 'u8[2048]{0}', space=vmem, size = 0x800, scoped, tag = 'input window, operand 1']
    #allocation7 [shape = 's32[2]{0}', space=sflag, size = 0x8, scoped, tag = 'scoped memory for tpu_custom_call.1']
    %9 = vsyncpa [#allocation5], 0
    %s10 = scalar_lea.sflag [#allocation5], 1
    %11 = vsyncpa %s10, 0
    %12 = vsyncpa [#allocation7], 0
    %s13 = scalar_lea.sflag [#allocation7], 1
    %14 = vsyncpa %s13, 0
    loop: start=0, step=1, limit=4
    $region2: #{tpu_custom_call.1} parent=1 // loop_pre_header
      _
    $region3: #{tpu_custom_call.1} parent=1 // loop_header
      %s16 = sphi 0, %s20
      %p17 = scmp.ge.s32.totalorder %s16, 4
      %s23 = sphi 0, %s35
      %s24 = sphi 0, %s31
      %s25 = sphi 0, %s23
      %s26 = sphi 0, %s24
      %s27 = sphi 0, %s25
      %s28 = sphi 0, %s26
      %s40 = sphi 0, %s42
      %s43 = sphi 0, %s40
      %s44 = sphi 0, %s43
      %s60 = sphi 0, %s44
      %s68 = sphi 0, %s70
      %s71 = sphi 0, %s68
      %s72 = sphi 0, %s71
      %s88 = sphi 0, %s72
      %s94 = sphi 0, %s96
      %s97 = sphi 0, %s94
      %s98 = sphi 0, %s97
      %s114 = sphi 0, %s98
      %s120 = sphi 0, %s122
      %s123 = sphi 0, %s120
      %s124 = sphi 0, %s123
      %s140 = sphi 0, %s124
    $region4: #{tpu_custom_call.1} parent=1 // loop_header_branch
      %19 = sbr.rel (%p17) target = $region8
    $region5: #{tpu_custom_call.1} parent=1 // loop_body
      %s21 = ssub.s32 %s16, 1
      %s22 = ssub.s32 %s16, 2
      %s29 = sadd.s32 1, %s24
      %p30 = scmp.ge.s32.totalorder %s29, 1
      %s31 = scalar_select %p30, 0, %s29
      %s32 = sadd.s32 1, %s23
      %s33 = scalar_select %p30, %s32, %s23
      %p34 = scmp.ge.s32.totalorder %s33, 2
      %s35 = scalar_select %p34, 0, %s33
      %s36 = ssub.s32 %s23, %s35
      %s37 = ssub.s32 %s24, %s31
      %s38 = sor.u32 %s36, %s37
      %p39 = scmp.eq.s32.totalorder %s38, 0
      %s41 = sadd.s32 %s40, 1
      %s42 = scalar_select %p39, %s40, %s41
      %p45 = pneg %p39
      %p46 = scmp.eq.s32.totalorder %s16, 1
      %p47 = por %p45, %p46
      %p48 = scmp.ne.s32.totalorder %s40, %s43
      %p49 = scmp.eq.s32.totalorder %s16, 0
      %p50 = por %p48, %p49
      %p51 = scmp.ne.s32.totalorder %s40, %s43
      %p52 = scmp.eq.s32.totalorder %s21, 1
      %p53 = por %p51, %p52
      %p54 = scmp.ne.s32.totalorder %s43, %s44
      %p55 = scmp.eq.s32.totalorder %s21, 0
      %p56 = por %p54, %p55
      %p57 = scmp.ne.s32.totalorder %s43, %s44
      %p58 = scmp.eq.s32.totalorder %s22, 1
      %p59 = por %p57, %p58
      %p61 = scmp.ne.s32.totalorder %s44, %s60
      %p62 = scmp.eq.s32.totalorder %s22, 0
      %p63 = por %p61, %p62
      %s64 = ssub.s32 %s23, %s35
      %s65 = ssub.s32 %s24, %s31
      %s66 = sor.u32 %s64, %s65
      %p67 = scmp.eq.s32.totalorder %s66, 0
      %s69 = sadd.s32 %s68, 1
      %s70 = scalar_select %p67, %s68, %s69
      %p73 = pneg %p67
      %p74 = scmp.eq.s32.totalorder %s16, 1
      %p75 = por %p73, %p74
      %p76 = scmp.ne.s32.totalorder %s68, %s71
      %p77 = scmp.eq.s32.totalorder %s16, 0
      %p78 = por %p76, %p77
      %p79 = scmp.ne.s32.totalorder %s68, %s71
      %p80 = scmp.eq.s32.totalorder %s21, 1
      %p81 = por %p79, %p80
      %p82 = scmp.ne.s32.totalorder %s71, %s72
      %p83 = scmp.eq.s32.totalorder %s21, 0
      %p84 = por %p82, %p83
      %p85 = scmp.ne.s32.totalorder %s71, %s72
      %p86 = scmp.eq.s32.totalorder %s22, 1
      %p87 = por %p85, %p86
      %p89 = scmp.ne.s32.totalorder %s72, %s88
      %p90 = scmp.eq.s32.totalorder %s22, 0
      %p91 = por %p89, %p90
      %s92 = ssub.s32 %s23, %s35
      %p93 = scmp.eq.s32.totalorder %s92, 0
      %s95 = sadd.s32 %s94, 1
      %s96 = scalar_select %p93, %s94, %s95
      %p99 = pneg %p93
      %p100 = scmp.eq.s32.totalorder %s16, 1
      %p101 = por %p99, %p100
      %p102 = scmp.ne.s32.totalorder %s94, %s97
      %p103 = scmp.eq.s32.totalorder %s16, 0
      %p104 = por %p102, %p103
      %p105 = scmp.ne.s32.totalorder %s94, %s97
      %p106 = scmp.eq.s32.totalorder %s21, 1
      %p107 = por %p105, %p106
      %p108 = scmp.ne.s32.totalorder %s97, %s98
      %p109 = scmp.eq.s32.totalorder %s21, 0
      %p110 = por %p108, %p109
      %p111 = scmp.ne.s32.totalorder %s97, %s98
      %p112 = scmp.eq.s32.totalorder %s22, 1
      %p113 = por %p111, %p112
      %p115 = scmp.ne.s32.totalorder %s98, %s114
      %p116 = scmp.eq.s32.totalorder %s22, 0
      %p117 = por %p115, %p116
      %s118 = ssub.s32 %s23, %s35
      %p119 = scmp.eq.s32.totalorder %s118, 0
      %s121 = sadd.s32 %s120, 1
      %s122 = scalar_select %p119, %s120, %s121
      %p125 = pneg %p119
      %p126 = scmp.eq.s32.totalorder %s16, 1
      %p127 = por %p125, %p126
      %p128 = scmp.ne.s32.totalorder %s120, %s123
      %p129 = scmp.eq.s32.totalorder %s16, 0
      %p130 = por %p128, %p129
      %p131 = scmp.ne.s32.totalorder %s120, %s123
      %p132 = scmp.eq.s32.totalorder %s21, 1
      %p133 = por %p131, %p132
      %p134 = scmp.ne.s32.totalorder %s123, %s124
      %p135 = scmp.eq.s32.totalorder %s21, 0
      %p136 = por %p134, %p135
      %p137 = scmp.ne.s32.totalorder %s123, %s124
      %p138 = scmp.eq.s32.totalorder %s22, 1
      %p139 = por %p137, %p138
      %p141 = scmp.ne.s32.totalorder %s124, %s140
      %p142 = scmp.eq.s32.totalorder %s22, 0
      %p143 = por %p141, %p142
      %p144 = scmp.le.s32.totalorder 1, %s16
      %p145 = scmp.lt.s32.totalorder %s16, 3
      %p146 = pnand %p144, %p145
      %p147 = pneg %p146
      // Predicated region
      $region9: #{tpu_custom_call.1} parent=5 // pred_check
        _
      $region10: #{tpu_custom_call.1} parent=5 // pred_check_branch
        %149 = sbr.rel (%p146) target = $region12
      $region11: #{tpu_custom_call.1} parent=5 // pred_region
        %s150 = ssub.s32 %s16, 1
      $region12: #{tpu_custom_call.1} parent=5 // pred_fallthru
        _
      %p151 = scmp.lt.s32.totalorder %s16, 2
      // Predicated region
      $region13: #{tpu_custom_call.1} parent=5 // pred_check
        %p152 = pneg %p151
      $region14: #{tpu_custom_call.1} parent=5 // pred_check_branch
        %154 = sbr.rel (%p152) target = $region16
      $region15: #{tpu_custom_call.1} parent=5 // pred_region
        // Predicated region
        $region17: #{tpu_custom_call.1} parent=15 // pred_check
          %p155 = pneg %p50
        $region18: #{tpu_custom_call.1} parent=15 // pred_check_branch
          %157 = sbr.rel (%p155) target = $region20
        $region19: #{tpu_custom_call.1} parent=15 // pred_region
          %s158 = sand.u32 %s40, 1
          %s159 = scalar_lea.sflag [#allocation5], %s158
          %s160 = sand.u32 %s40, 1
          %s161 = smul.addr %s160, 8
          %s162 = scalar_lea.vmem [#allocation4], %s161
          %s163 = smul.u32 2, %s24
          %s165 = ssub.s32 128, 128
          %166 = vsyncadd %s159, %s165
          %s167 = smul.addr %s23, 2
          %s168 = sadd.s32 %s163, %s167
          %s169 = smul.addr %s168, 64
          %s170 = scalar_lea.hbm %s0, %s169
          %s172 = sshll.u32 %s162, 4
          %s173 = int_to_ptr.vmem [resolvable:$true] %s172
          %175 = dma.hbm_to_vmem [thread:$0]  %s170, 128, %s173, %s159
        $region20: #{tpu_custom_call.1} parent=15 // pred_fallthru
          _
        // Predicated region
        $region21: #{tpu_custom_call.1} parent=15 // pred_check
          %p176 = pneg %p78
        $region22: #{tpu_custom_call.1} parent=15 // pred_check_branch
          %178 = sbr.rel (%p176) target = $region24
        $region23: #{tpu_custom_call.1} parent=15 // pred_region
          %s179 = sand.u32 %s68, 1
          %s180 = scalar_lea.sflag [#allocation7], %s179
          %s181 = sand.u32 %s68, 1
          %s182 = smul.addr %s181, 2
          %s183 = scalar_lea.vmem [#allocation6], %s182
          %s184 = smul.u32 2, %s24
          %s186 = ssub.s32 32, 32
          %187 = vsyncadd %s180, %s186
          %s188 = smul.addr %s23, 2
          %s189 = sadd.s32 %s184, %s188
          %s190 = smul.addr %s189, 16
          %s191 = scalar_lea.hbm %s1, %s190
          %s193 = sshll.u32 %s183, 4
          %s194 = int_to_ptr.vmem [resolvable:$true] %s193
          %196 = dma.hbm_to_vmem [thread:$0]  %s191, 32, %s194, %s180
        $region24: #{tpu_custom_call.1} parent=15 // pred_fallthru
          _
      $region16: #{tpu_custom_call.1} parent=5 // pred_fallthru
        _
      %p197 = scmp.le.s32.totalorder 1, %s16
      %p198 = scmp.lt.s32.totalorder %s16, 3
      %p199 = pnand %p197, %p198
      %p200 = pneg %p199
      // Predicated region
      $region25: #{tpu_custom_call.1} parent=5 // pred_check
        _
      $region26: #{tpu_custom_call.1} parent=5 // pred_check_branch
        %202 = sbr.rel (%p199) target = $region28
      $region27: #{tpu_custom_call.1} parent=5 // pred_region
        %s203 = ssub.s32 %s16, 1
        %s204 = sand.u32 %s43, 1
        %s205 = scalar_lea.sflag [#allocation5], %s204
        %s206 = sand.u32 %s43, 1
        %s207 = smul.addr %s206, 8
        %s208 = scalar_lea.vmem [#allocation4], %s207
        // Predicated region
        $region29: #{tpu_custom_call.1} parent=27 // pred_check
          %p209 = pneg %p56
        $region30: #{tpu_custom_call.1} parent=27 // pred_check_branch
          %211 = sbr.rel (%p209) target = $region32
        $region31: #{tpu_custom_call.1} parent=27 // pred_region
          %212 = dma.done %s205, 128
        $region32: #{tpu_custom_call.1} parent=27 // pred_fallthru
          _
        %s213 = sand.u32 %s71, 1
        %s214 = scalar_lea.sflag [#allocation7], %s213
        %s215 = sand.u32 %s71, 1
        %s216 = smul.addr %s215, 2
        %s217 = scalar_lea.vmem [#allocation6], %s216
        // Predicated region
        $region33: #{tpu_custom_call.1} parent=27 // pred_check
          %p218 = pneg %p84
        $region34: #{tpu_custom_call.1} parent=27 // pred_check_branch
          %220 = sbr.rel (%p218) target = $region36
        $region35: #{tpu_custom_call.1} parent=27 // pred_region
          %221 = dma.done %s214, 32
        $region36: #{tpu_custom_call.1} parent=27 // pred_fallthru
          _
        %s222 = sand.u32 %s43, 1
        %s223 = scalar_lea.sflag [#allocation5], %s222
        %s224 = sand.u32 %s43, 1
        %s225 = smul.addr %s224, 8
        %s226 = scalar_lea.vmem [#allocation4], %s225
        %p227 = pneg %p56
        %p228 = pneg %p53
        %s229 = sand.u32 %s71, 1
        %s230 = scalar_lea.sflag [#allocation7], %s229
        %s231 = sand.u32 %s71, 1
        %s232 = smul.addr %s231, 2
        %s233 = scalar_lea.vmem [#allocation6], %s232
        %p234 = pneg %p84
        %p235 = pneg %p81
        %p236 = pneg %p110
        %p237 = pneg %p107
        %p238 = scmp.lt.s32.totalorder %s25, 1
        %s239 = scalar_select %p238, %s25, 1
        %s240 = scalar_lea.vmem %s2, %s239
        %p241 = pneg %p136
        %p242 = pneg %p133
        %p243 = scmp.lt.s32.totalorder %s25, 1
        %s244 = scalar_select %p243, %s25, 1
        %s245 = scalar_lea.vmem %s3, %s244
        %s246 = smul.u32 2, %s26
        %s247 = smul.u32 2, %s26
        %p248 = scmp.lt.s32.totalorder %s25, 1
        %s249 = scalar_select %p248, %s25, 1
        %s250 = scalar_lea.vmem %s2, %s249
        %p251 = scmp.lt.s32.totalorder %s25, 1
        %s252 = scalar_select %p251, %s25, 1
        %s253 = scalar_lea.vmem %s3, %s252
        %p254 = scmp.eq.s32.totalorder %s26, 0
        // Predicated region
        $region37: #{tpu_custom_call.1} parent=27 // pred_check
          %p255 = pneg %p254
        $region38: #{tpu_custom_call.1} parent=27 // pred_check_branch
          %257 = sbr.rel (%p255) target = $region40
        $region39: #{tpu_custom_call.1} parent=27 // pred_region
          %v258 = vlaneseq
          %vm259 = vcmp.ge.s32.totalorder %v258, 0
          %vm260 = vcmp.lt.s32.totalorder %v258, 256
          %vm261 = vmand %vm259, %vm260
          %262 = vst.msk [vmem:[#allocation2] sm:$0x3] %vm261, 0.0
          %263 = vst.msk [vmem:[#allocation3] sm:$0x3] %vm261, 0.0
        $region40: #{tpu_custom_call.1} parent=27 // pred_fallthru
          _
        %v264 = vld [vmem:[%s208] sm:$0xff]
        %v265 = vld [vmem:[%s217] sm:$0x3]
        %v267 = vcombine.high %v264, %v264
        %vm269 = vcmask 1043456
        %v270 = vsel %vm269, %v264, -inf
        %v271 = vrot.slane %v270, 4
        %v272 = vmax.f32 %v270, %v271
        %v273 = vrot.slane %v272, 2
        %v274 = vmax.f32 %v272, %v273
        %v275 = vrot.slane %v274, 1
        %v276 = vmax.f32 %v274, %v275
        %v277 = vsel %vm269, %v267, -inf
        %v278 = vrot.slane %v277, 4
        %v279 = vmax.f32 %v277, %v278
        %v280 = vrot.slane %v279, 2
        %v281 = vmax.f32 %v279, %v280
        %v282 = vrot.slane %v281, 1
        %v283 = vmax.f32 %v281, %v282
        %v286 = vcombine.low %v276, %v283
        %v288 = vsub.f32 %v264, %v286
        %v289 = vmul.f32 %v288, 1.442695
        %v290 = vpow.pop %v289
        %v292 = vcombine.high %v290, %v290
        %v294 = vsel %vm269, %v290, 0.0
        %v295 = vrot.slane %v294, 4
        %v296 = vadd.f32 %v294, %v295
        %v297 = vrot.slane %v296, 2
        %v298 = vadd.f32 %v296, %v297
        %v299 = vrot.slane %v298, 1
        %v300 = vadd.f32 %v298, %v299
        %v301 = vsel %vm269, %v292, 0.0
        %v302 = vrot.slane %v301, 4
        %v303 = vadd.f32 %v301, %v302
        %v304 = vrot.slane %v303, 2
        %v305 = vadd.f32 %v303, %v304
        %v306 = vrot.slane %v305, 1
        %v307 = vadd.f32 %v305, %v306
        %v308 = vlog2.pop %v300
        %v309 = vmul.f32 %v308, 0.6931472
        %v310 = vlog2.pop %v307
        %v311 = vmul.f32 %v310, 0.6931472
        %v312 = vlaneseq
        %v313 = vshrl.u32 %v312, 7
        %v314 = vlaneseq
        %v315 = vshrl.u32 %v314, 7
        %v316 = vsub.s32 0, %v315
        %v317 = vrot.slane %v265, %v316
        %v318 = vlaneseq
        %v319 = vshrl.u32 %v318, 7
        %v320 = vsub.s32 1, %v319
        %v321 = vrot.slane %v265, %v320
        %vm322 = vcmp.eq.s32.totalorder %v313, %v317
        %vm323 = vcmp.eq.s32.totalorder %v313, %v321
        %v325 = vcombine.high %v288, %v288
        %v327 = vsel %vm322, %v288, 0.0
        %v328 = vsel %vm323, %v325, 0.0
        %v329 = vsel %vm269, %v327, 0.0
        %v330 = vrot.slane %v329, 4
        %v331 = vadd.f32 %v329, %v330
        %v332 = vrot.slane %v331, 2
        %v333 = vadd.f32 %v331, %v332
        %v334 = vrot.slane %v333, 1
        %v335 = vadd.f32 %v333, %v334
        %v336 = vsel %vm269, %v328, 0.0
        %v337 = vrot.slane %v336, 4
        %v338 = vadd.f32 %v336, %v337
        %v339 = vrot.slane %v338, 2
        %v340 = vadd.f32 %v338, %v339
        %v341 = vrot.slane %v340, 1
        %v342 = vadd.f32 %v340, %v341
        %v343 = vsub.f32 %v309, %v335
        %v344 = vsub.f32 %v311, %v342
        %vm345 = vcmp.ge.s32.totalorder %v265, 0
        %vm346 = vcmp.lt.s32.totalorder %v265, 4
        %vm347 = vmand %vm345, %vm346
        %v348 = vld [vmem:[#allocation2] sm:$0x3]
        %v351 = vcombine.low %v343, %v344
        %v353 = vunpack.c.l.s4 1966171168
        %v354 = vunpack.c.0.s8 %v353
        %v355 = vlaneseq
        %v356 = vshrl.u32 %v355, 7
        %v357 = vsub.s32 %v354, %v356
        %v358 = vrot.slane %v351, %v357
        %v360 = vunpack.c.l.s4 1966171168
        %v361 = vunpack.c.0.s8 %v360
        %v362 = vlaneseq
        %v363 = vshrl.u32 %v362, 7
        %v364 = vsub.s32 %v361, %v363
        %v365 = vrot.slane %v358, %v364
        %v367 = vsel %vm347, %v365, 0.0
        %v368 = vadd.f32 %v348, %v367
        %v369 = vlaneseq
        %vm370 = vcmp.ge.s32.totalorder %v369, 0
        %vm371 = vcmp.lt.s32.totalorder %v369, 256
        %vm372 = vmand %vm370, %vm371
        %373 = vst.msk [vmem:[#allocation2] sm:$0x3] %vm372, %v368
        %v374 = vld [vmem:[#allocation3] sm:$0x3]
        %v375 = vsel %vm347, 1, 0
        %v376 = vcvt.s32.f32 %v375
        %v377 = vadd.f32 %v374, %v376
        %378 = vst.msk [vmem:[#allocation3] sm:$0x3] %vm372, %v377
        // Predicated region
        $region41: #{tpu_custom_call.1} parent=27 // pred_check
          %p379 = pneg %p254
        $region42: #{tpu_custom_call.1} parent=27 // pred_check_branch
          %381 = sbr.rel (%p379) target = $region44
        $region43: #{tpu_custom_call.1} parent=27 // pred_region
          %v382 = vld [vmem:[#allocation2] sm:$0x3]
          %v384 = vlaneseq
          %v385 = vshrl.u32 %v384, 7
          %v386 = vsub.s32 0, %v385
          %v387 = vrot.slane %v382, %v386
          %v388 = vlaneseq
          %v389 = vshrl.u32 %v388, 7
          %v390 = vsub.s32 1, %v389
          %v391 = vrot.slane %v382, %v390
          %vm394 = vcmask 1040384
          %v395 = vsel %vm394, %v387, 0.0
          %v396 = vsel %vm394, %v391, 0.0
          %v397 = vadd.f32 %v395, %v396
          %398 = vadd.xlane.f32.xlu0 %v397
          %v399 = vpop.xlane.xlu0 %398
          %vm400 = vcmask 0
          %401 = vst.msk [vmem:[%s250] sm:$0x1] %vm400, %v399
          %v402 = vld [vmem:[#allocation3] sm:$0x3]
          %v404 = vlaneseq
          %v405 = vshrl.u32 %v404, 7
          %v406 = vsub.s32 0, %v405
          %v407 = vrot.slane %v402, %v406
          %v408 = vlaneseq
          %v409 = vshrl.u32 %v408, 7
          %v410 = vsub.s32 1, %v409
          %v411 = vrot.slane %v402, %v410
          %v414 = vsel %vm394, %v407, 0.0
          %v415 = vsel %vm394, %v411, 0.0
          %v416 = vadd.f32 %v414, %v415
          %417 = vadd.xlane.f32.xlu0 %v416
          %v418 = vpop.xlane.xlu0 %417
          %419 = vst.msk [vmem:[%s253] sm:$0x1] %vm400, %v418
        $region44: #{tpu_custom_call.1} parent=27 // pred_fallthru
          _
        %p420 = scmp.lt.s32.totalorder %s25, 1
        %s421 = scalar_select %p420, %s25, 1
        %s422 = scalar_lea.vmem %s2, %s421
        %p423 = scmp.lt.s32.totalorder %s25, 1
        %s424 = scalar_select %p423, %s25, 1
        %s425 = scalar_lea.vmem %s3, %s424
        // Predicated region
        $region45: #{tpu_custom_call.1} parent=27 // pred_check
          %p426 = pneg %p107
        $region46: #{tpu_custom_call.1} parent=27 // pred_check_branch
          %428 = sbr.rel (%p426) target = $region48
        $region47: #{tpu_custom_call.1} parent=27 // pred_region
          _
        $region48: #{tpu_custom_call.1} parent=27 // pred_fallthru
          _
        // Predicated region
        $region49: #{tpu_custom_call.1} parent=27 // pred_check
          %p429 = pneg %p133
        $region50: #{tpu_custom_call.1} parent=27 // pred_check_branch
          %431 = sbr.rel (%p429) target = $region52
        $region51: #{tpu_custom_call.1} parent=27 // pred_region
          _
        $region52: #{tpu_custom_call.1} parent=27 // pred_fallthru
          _
      $region28: #{tpu_custom_call.1} parent=5 // pred_fallthru
        _
      %p432 = scmp.le.s32.totalorder 2, %s16
      // Predicated region
      $region53: #{tpu_custom_call.1} parent=5 // pred_check
        %p433 = pneg %p432
      $region54: #{tpu_custom_call.1} parent=5 // pred_check_branch
        %435 = sbr.rel (%p433) target = $region56
      $region55: #{tpu_custom_call.1} parent=5 // pred_region
        %s436 = ssub.s32 %s16, 2
        // Predicated region
        $region57: #{tpu_custom_call.1} parent=55 // pred_check
          %p437 = pneg %p113
        $region58: #{tpu_custom_call.1} parent=55 // pred_check_branch
          %439 = sbr.rel (%p437) target = $region60
        $region59: #{tpu_custom_call.1} parent=55 // pred_region
          %p440 = scmp.lt.s32.totalorder %s27, 1
          %s441 = scalar_select %p440, %s27, 1
          %s442 = scalar_lea.vmem %s2, %s441
        $region60: #{tpu_custom_call.1} parent=55 // pred_fallthru
          _
        // Predicated region
        $region61: #{tpu_custom_call.1} parent=55 // pred_check
          %p443 = pneg %p139
        $region62: #{tpu_custom_call.1} parent=55 // pred_check_branch
          %445 = sbr.rel (%p443) target = $region64
        $region63: #{tpu_custom_call.1} parent=55 // pred_region
          %p446 = scmp.lt.s32.totalorder %s27, 1
          %s447 = scalar_select %p446, %s27, 1
          %s448 = scalar_lea.vmem %s3, %s447
        $region64: #{tpu_custom_call.1} parent=55 // pred_fallthru
          _
      $region56: #{tpu_custom_call.1} parent=5 // pred_fallthru
        _
    $region6: #{tpu_custom_call.1} parent=1 // loop_footer
      %s20 = sadd.s32 1, %s16
    $region7: #{tpu_custom_call.1} parent=1 // loop_footer_branch
      %15 = sbr.rel target = $region3
    $region8: #{tpu_custom_call.1} parent=1 // loop_exit
      _
    %449 = vsyncpa [#allocation5], 1
    %s450 = scalar_lea.sflag [#allocation5], 1
    %451 = vsyncpa %s450, 1
    %452 = vsyncpa [#allocation7], 1
    %s453 = scalar_lea.sflag [#allocation7], 1
    %454 = vsyncpa %s453, 1

</llo_original>
